<compile_context>
chip_gen: v7x
topology: tpu7x:2x2x1
jax: 0.10.0
libtpu: 0.0.40
codegen_flags: <defaults>
</compile_context>

<pallas_src>
import jax
import jax.numpy as jnp
from jax import lax
from jax.experimental import pallas as pl
from jax.experimental.pallas import tpu as pltpu

_EPS_NORM = 1e-12   # F.normalize default eps
_EPS_BN = 1e-5      # BatchNorm1d default eps
_LANES = 128
_HID = 128
_IN_F = 256


def _round_up(x, m):
    return ((x + m - 1) // m) * m


def _build_kernel(n, np_, inv_numel):
    """Builds the kernel closed over static config (batch size, padding, 1/numel)."""
    need_mask = (np_ != n)
    inv_n = 1.0 / float(n)

    def kernel(pred_ref, gt_ref, feat_ref, wpre_ref, wfc_ref, pv_ref,
               out_ref, sse_ref):
        i = pl.program_id(0)
        nsteps = pl.num_programs(0)

        # ---- loss1 accumulation: sum of squared errors over this block ----
        @pl.when(i == 0)
        def _():
            sse_ref[0] = jnp.float32(0.0)

        d = pred_ref[...] - gt_ref[...]
        sse_ref[0] += jnp.sum(d * d)

        # ---- final step: feature-transform path + combine ----
        @pl.when(i == nsteps - 1)
        def _():
            pv = pv_ref[...]                      # (8, 128) packed params
            g1 = pv[0:1, :]
            b1 = pv[1:2, :]
            bfc = pv[2:3, :]
            g2 = pv[3:4, :]
            b2 = pv[4:5, :]

            x = feat_ref[...]                     # (3*Np, 256), pads are zero

            # F.normalize(f, p=2, dim=1)  (rsqrt -> EUP, multiply instead of divide)
            ssq = jnp.sum(x * x, axis=1, keepdims=True)
            x = x * lax.rsqrt(jnp.maximum(ssq, _EPS_NORM * _EPS_NORM))

            # fc_pre: Linear(256 -> 128, bias=False), one matmul for all 3 inputs
            x = jnp.dot(x, wpre_ref[...], preferred_element_type=jnp.float32)

            # BatchNorm1d(128), training mode, per-segment stats.
            # Padded rows are exactly zero here, so sum/N is the true mean.
            xs = x.reshape(3, np_, _HID)
            mu = jnp.sum(xs, axis=1, keepdims=True) * inv_n
            ex2 = jnp.sum(xs * xs, axis=1, keepdims=True) * inv_n
            inv_std = lax.rsqrt(ex2 - mu * mu + _EPS_BN)
            scale = g1 * inv_std
            shift = b1 - mu * scale
            x = jnp.maximum(xs * scale + shift, 0.0).reshape(3 * np_, _HID)

            # Linear(128 -> 128)
            x = jnp.dot(x, wfc_ref[...], preferred_element_type=jnp.float32) + bfc

            xs = x.reshape(3, np_, _HID)
            if need_mask:
                ri = lax.broadcasted_iota(jnp.int32, (np_, _HID), 0)
                mask = (ri < n).astype(jnp.float32)     # (Np, 128), zero on pad rows
                xs = xs * mask

            # BatchNorm1d(128) #2, per-segment stats
            mu = jnp.sum(xs, axis=1, keepdims=True) * inv_n
            ex2 = jnp.sum(xs * xs, axis=1, keepdims=True) * inv_n
            inv_std = lax.rsqrt(ex2 - mu * mu + _EPS_BN)
            scale = g2 * inv_std
            shift = b2 - mu * scale
            xs = xs * scale + shift
            if need_mask:
                xs = xs * mask

            # F.normalize(x, p=2, dim=1)
            ssq = jnp.sum(xs * xs, axis=2, keepdims=True)
            t = xs * lax.rsqrt(jnp.maximum(ssq, _EPS_NORM * _EPS_NORM))

            t1, t2, t3 = t[0], t[1], t[2]

            def pdist(a, b):
                dd = a - b
                rn = jnp.sqrt(jnp.sum(dd * dd, axis=1, keepdims=True))
                return jnp.sum(rn) * inv_n      # padded rows contribute 0

            loss2 = pdist(t1, t2) + pdist(t1, t3) + pdist(t2, t3)
            out_ref[0, 0] = sse_ref[0] * inv_numel + loss2

    return kernel


def init_params(key):
    """Deterministic synthetic parameters matching the PyTorch module shapes."""
    k1, k2, k3 = jax.random.split(key, 3)
    in_f, hid = _IN_F, _HID
    w_pre = jax.random.uniform(k1, (hid, in_f), jnp.float32,
                               minval=-1.0 / (in_f ** 0.5),
                               maxval=1.0 / (in_f ** 0.5))
    w_fc = jax.random.uniform(k2, (hid, hid), jnp.float32,
                              minval=-1.0 / (hid ** 0.5),
                              maxval=1.0 / (hid ** 0.5))
    b_fc = jax.random.uniform(k3, (hid,), jnp.float32,
                              minval=-1.0 / (hid ** 0.5),
                              maxval=1.0 / (hid ** 0.5))
    return dict(w_pre=w_pre,
                gamma1=jnp.ones((hid,), jnp.float32),
                beta1=jnp.zeros((hid,), jnp.float32),
                w_fc=w_fc, b_fc=b_fc,
                gamma2=jnp.ones((hid,), jnp.float32),
                beta2=jnp.zeros((hid,), jnp.float32))


def wmyloss_dis(pred, gt, f1, f2, f3, params):
    # ---- MSE slab: sublane-dense (rows, 128), zero-padded, tiled over a grid ----
    pred_flat = pred.astype(jnp.float32).reshape(-1)
    gt_flat = gt.astype(jnp.float32).reshape(-1)
    numel = pred_flat.shape[0]

    total_rows = -(-numel // _LANES)
    tile_rows = min(512, _round_up(total_rows, 8))     # (512,128) f32 = 256 KiB/block
    padded_rows = _round_up(total_rows, tile_rows)
    pad = padded_rows * _LANES - numel
    pred2 = jnp.pad(pred_flat, (0, pad)).reshape(padded_rows, _LANES)
    gt2 = jnp.pad(gt_flat, (0, pad)).reshape(padded_rows, _LANES)
    n_blocks = padded_rows // tile_rows

    # ---- features: stack 3 inputs, pad batch to a multiple of 8 sublanes ----
    n = f1.shape[0]
    np_ = _round_up(max(n, 8), 8)

    def pad_feat(f):
        return jnp.pad(f.astype(jnp.float32), ((0, np_ - n), (0, 0)))

    feats = jnp.concatenate([pad_feat(f1), pad_feat(f2), pad_feat(f3)], axis=0)

    # ---- weights (pre-transposed) and packed per-feature parameter vectors ----
    wpre_t = params["w_pre"].T.astype(jnp.float32)       # (256, 128)
    wfc_t = params["w_fc"].T.astype(jnp.float32)         # (128, 128)
    pv = jnp.zeros((8, _HID), jnp.float32)
    pv = pv.at[0].set(params["gamma1"])
    pv = pv.at[1].set(params["beta1"])
    pv = pv.at[2].set(params["b_fc"])
    pv = pv.at[3].set(params["gamma2"])
    pv = pv.at[4].set(params["beta2"])

    kernel = _build_kernel(n=n, np_=np_, inv_numel=1.0 / float(numel))

    out = pl.pallas_call(
        kernel,
        out_shape=jax.ShapeDtypeStruct((1, 1), jnp.float32),
        grid=(n_blocks,),
        in_specs=[
            pl.BlockSpec((tile_rows, _LANES), lambda i: (i, 0)),   # pred blocks
            pl.BlockSpec((tile_rows, _LANES), lambda i: (i, 0)),   # gt blocks
            pl.BlockSpec((3 * np_, _IN_F), lambda i: (0, 0)),      # stacked feats (resident)
            pl.BlockSpec((_IN_F, _HID), lambda i: (0, 0)),         # w_pre^T (resident)
            pl.BlockSpec((_HID, _HID), lambda i: (0, 0)),          # w_fc^T (resident)
            pl.BlockSpec((8, _HID), lambda i: (0, 0)),             # packed params (resident)
        ],
        out_specs=pl.BlockSpec((1, 1), lambda i: (0, 0),
                               memory_space=pltpu.MemorySpace.SMEM),
        scratch_shapes=[pltpu.SMEM((1,), jnp.float32)],            # SSE accumulator
        compiler_params=pltpu.CompilerParams(
            dimension_semantics=("arbitrary",)),                   # carries the accumulator
    )(pred2, gt2, feats, wpre_t, wfc_t, pv)
    return out[0, 0]


def _reference(pred, gt, f1, f2, f3, params):
    """Pure-JAX reference for a correctness check."""
    def transform(f):
        x = f / jnp.maximum(jnp.linalg.norm(f, axis=1, keepdims=True), _EPS_NORM)
        x = x @ params["w_pre"].T
        mu = x.mean(0); var = ((x - mu) ** 2).mean(0)
        x = (x - mu) / jnp.sqrt(var + _EPS_BN) * params["gamma1"] + params["beta1"]
        x = jnp.maximum(x, 0.0)
        x = x @ params["w_fc"].T + params["b_fc"]
        mu = x.mean(0); var = ((x - mu) ** 2).mean(0)
        x = (x - mu) / jnp.sqrt(var + _EPS_BN) * params["gamma2"] + params["beta2"]
        return x / jnp.maximum(jnp.linalg.norm(x, axis=1, keepdims=True), _EPS_NORM)

    def dis(a, b):
        return jnp.linalg.norm(a - b, axis=1).mean()

    t1, t2, t3 = transform(f1), transform(f2), transform(f3)
    return jnp.mean((pred - gt) ** 2) + dis(t1, t2) + dis(t1, t3) + dis(t2, t3)


if __name__ == "__main__":
    key = jax.random.PRNGKey(0)
    kp, kpred, kgt, kf1, kf2, kf3 = jax.random.split(key, 6)

    params = init_params(kp)

    # Small shapes consistent with the forward: pred/gt arbitrary (MSE), feats (N, 256)
    pred = jax.random.normal(kpred, (2, 4, 16, 16), jnp.float32)
    gt = jax.random.normal(kgt, (2, 4, 16, 16), jnp.float32)
    f1 = jax.random.normal(kf1, (8, 256), jnp.float32)
    f2 = jax.random.normal(kf2, (8, 256), jnp.float32)
    f3 = jax.random.normal(kf3, (8, 256), jnp.float32)

    loss = jax.block_until_ready(wmyloss_dis(pred, gt, f1, f2, f3, params))
    ref = jax.block_until_ready(_reference(pred, gt, f1, f2, f3, params))
    assert jnp.allclose(loss, ref, rtol=1e-4, atol=1e-4), (loss, ref)

    print("KERNEL_OK")
</pallas_src>

<mosaic_0001>
module attributes {stable_mosaic.version = 11 : i64} {
  func.func @kernel(%arg0: i32, %arg1: memref<16x128xf32, #tpu.memory_space<vmem>>, %arg2: memref<16x128xf32, #tpu.memory_space<vmem>>, %arg3: memref<24x256xf32, #tpu.memory_space<vmem>>, %arg4: memref<256x128xf32, #tpu.memory_space<vmem>>, %arg5: memref<128x128xf32, #tpu.memory_space<vmem>>, %arg6: memref<8x128xf32, #tpu.memory_space<vmem>>, %arg7: memref<1x1xf32, #tpu.memory_space<smem>>, %arg8: memref<1xf32, #tpu.memory_space<smem>>) attributes {dimension_semantics = [#tpu.dimension_semantics<arbitrary>], iteration_bounds = array<i64: 1>, scalar_prefetch = 0 : i64, scratch_operands = 1 : i64, tpu.core_type = #tpu.core_type<tc>, window_params = [{transform_indices = @transform_0, window_bounds = array<i64: 16, 128>}, {transform_indices = @transform_1, window_bounds = array<i64: 16, 128>}, {pipeline_mode = #tpu.pipeline_mode<synchronous>, transform_indices = @transform_2, window_bounds = array<i64: 24, 256>}, {pipeline_mode = #tpu.pipeline_mode<synchronous>, transform_indices = @transform_3, window_bounds = array<i64: 256, 128>}, {pipeline_mode = #tpu.pipeline_mode<synchronous>, transform_indices = @transform_4, window_bounds = array<i64: 128, 128>}, {pipeline_mode = #tpu.pipeline_mode<synchronous>, transform_indices = @transform_5, window_bounds = array<i64: 8, 128>}, {transform_indices = @transform_6, window_bounds = array<i64: 1, 1>}]} {
    %c0_i32 = arith.constant 0 : i32
    %0 = arith.cmpi eq, %arg0, %c0_i32 : i32
    %1 = arith.extui %0 : i1 to i32
    %c0_i32_0 = arith.constant 0 : i32
    %2 = arith.cmpi ne, %1, %c0_i32_0 : i32
    scf.if %2 {
      %cst_8 = arith.constant 0.000000e+00 : f32
      %c0_9 = arith.constant 0 : index
      %17 = memref.load %arg8[%c0_9] : memref<1xf32, #tpu.memory_space<smem>>
      memref.store %cst_8, %arg8[%c0_9] : memref<1xf32, #tpu.memory_space<smem>>
    } else {
    }
    %c0 = arith.constant 0 : index
    %c0_1 = arith.constant 0 : index
    %3 = vector.load %arg1[%c0, %c0_1] : memref<16x128xf32, #tpu.memory_space<vmem>>, vector<16x128xf32>
    %c0_2 = arith.constant 0 : index
    %c0_3 = arith.constant 0 : index
    %4 = vector.load %arg2[%c0_2, %c0_3] : memref<16x128xf32, #tpu.memory_space<vmem>>, vector<16x128xf32>
    %5 = arith.subf %3, %4 : vector<16x128xf32>
    %c0_4 = arith.constant 0 : index
    %6 = memref.load %arg8[%c0_4] : memref<1xf32, #tpu.memory_space<smem>>
    %7 = arith.mulf %5, %5 : vector<16x128xf32>
    %8 = vector.shape_cast %7 : vector<16x128xf32> to vector<1x16x128xf32>
    %cst = arith.constant dense<0.000000e+00> : vector<1xf32>
    %9 = vector.multi_reduction <add>, %8, %cst [1, 2] : vector<1x16x128xf32> to vector<1xf32>
    %10 = vector.shape_cast %9 : vector<1xf32> to vector<1x1x1xf32>
    %11 = vector.extract %10[0, 0, 0] : f32 from vector<1x1x1xf32>
    %12 = arith.addf %6, %11 : f32
    %c0_5 = arith.constant 0 : index
    %13 = memref.load %arg8[%c0_5] : memref<1xf32, #tpu.memory_space<smem>>
    memref.store %12, %arg8[%c0_5] : memref<1xf32, #tpu.memory_space<smem>>
    %c0_i32_6 = arith.constant 0 : i32
    %14 = arith.cmpi eq, %arg0, %c0_i32_6 : i32
    %15 = arith.extui %14 : i1 to i32
    %c0_i32_7 = arith.constant 0 : i32
    %16 = arith.cmpi ne, %15, %c0_i32_7 : i32
    scf.if %16 {
      %c0_8 = arith.constant 0 : index
      %c0_9 = arith.constant 0 : index
      %17 = vector.load %arg6[%c0_8, %c0_9] : memref<8x128xf32, #tpu.memory_space<vmem>>, vector<8x128xf32>
      %18 = vector.extract_strided_slice %17 {offsets = [0, 0], sizes = [1, 128], strides = [1, 1]} : vector<8x128xf32> to vector<1x128xf32>
      %19 = vector.extract_strided_slice %17 {offsets = [1, 0], sizes = [1, 128], strides = [1, 1]} : vector<8x128xf32> to vector<1x128xf32>
      %20 = vector.extract_strided_slice %17 {offsets = [2, 0], sizes = [1, 128], strides = [1, 1]} : vector<8x128xf32> to vector<1x128xf32>
      %21 = vector.extract_strided_slice %17 {offsets = [3, 0], sizes = [1, 128], strides = [1, 1]} : vector<8x128xf32> to vector<1x128xf32>
      %22 = vector.extract_strided_slice %17 {offsets = [4, 0], sizes = [1, 128], strides = [1, 1]} : vector<8x128xf32> to vector<1x128xf32>
      %c0_10 = arith.constant 0 : index
      %c0_11 = arith.constant 0 : index
      %23 = vector.load %arg3[%c0_10, %c0_11] : memref<24x256xf32, #tpu.memory_space<vmem>>, vector<24x256xf32>
      %24 = arith.mulf %23, %23 : vector<24x256xf32>
      %cst_12 = arith.constant dense<0.000000e+00> : vector<24xf32>
      %25 = vector.multi_reduction <add>, %24, %cst_12 [1] : vector<24x256xf32> to vector<24xf32>
      %26 = vector.shape_cast %25 : vector<24xf32> to vector<24x1xf32>
      %cst_13 = arith.constant 1.000000e-24 : f32
      %27 = vector.broadcast %cst_13 : f32 to vector<24x1xf32>
      %28 = arith.maximumf %26, %27 : vector<24x1xf32>
      %29 = math.rsqrt %28 : vector<24x1xf32>
      %30 = vector.broadcast %29 : vector<24x1xf32> to vector<24x256xf32>
      %31 = arith.mulf %23, %30 : vector<24x256xf32>
      %c0_14 = arith.constant 0 : index
      %c0_15 = arith.constant 0 : index
      %32 = vector.load %arg4[%c0_14, %c0_15] : memref<256x128xf32, #tpu.memory_space<vmem>>, vector<256x128xf32>
      %cst_16 = arith.constant dense<0.000000e+00> : vector<24x128xf32>
      %33 = tpu.matmul %31, %32, %cst_16 {dimension_numbers = #tpu.dot_dimension_numbers<[1], [0], [0], [1], [0, 0, 1, 1], [], []>} : vector<24x256xf32>, vector<256x128xf32>, vector<24x128xf32> -> vector<24x128xf32>
      %34 = vector.shape_cast %33 : vector<24x128xf32> to vector<3x8x128xf32>
      %cst_17 = arith.constant dense<0.000000e+00> : vector<3x128xf32>
      %35 = vector.multi_reduction <add>, %34, %cst_17 [1] : vector<3x8x128xf32> to vector<3x128xf32>
      %36 = vector.shape_cast %35 : vector<3x128xf32> to vector<3x1x128xf32>
      %cst_18 = arith.constant 1.250000e-01 : f32
      %37 = vector.broadcast %cst_18 : f32 to vector<3x1x128xf32>
      %38 = arith.mulf %36, %37 : vector<3x1x128xf32>
      %39 = arith.mulf %34, %34 : vector<3x8x128xf32>
      %cst_19 = arith.constant dense<0.000000e+00> : vector<3x128xf32>
      %40 = vector.multi_reduction <add>, %39, %cst_19 [1] : vector<3x8x128xf32> to vector<3x128xf32>
      %41 = vector.shape_cast %40 : vector<3x128xf32> to vector<3x1x128xf32>
      %cst_20 = arith.constant 1.250000e-01 : f32
      %42 = vector.broadcast %cst_20 : f32 to vector<3x1x128xf32>
      %43 = arith.mulf %41, %42 : vector<3x1x128xf32>
      %44 = arith.mulf %38, %38 : vector<3x1x128xf32>
      %45 = arith.subf %43, %44 : vector<3x1x128xf32>
      %cst_21 = arith.constant 9.99999974E-6 : f32
      %46 = vector.broadcast %cst_21 : f32 to vector<3x1x128xf32>
      %47 = arith.addf %45, %46 : vector<3x1x128xf32>
      %48 = math.rsqrt %47 : vector<3x1x128xf32>
      %49 = vector.shape_cast %18 : vector<1x128xf32> to vector<1x1x128xf32>
      %50 = vector.broadcast %49 : vector<1x1x128xf32> to vector<3x1x128xf32>
      %51 = arith.mulf %50, %48 : vector<3x1x128xf32>
      %52 = arith.mulf %38, %51 : vector<3x1x128xf32>
      %53 = vector.shape_cast %19 : vector<1x128xf32> to vector<1x1x128xf32>
      %54 = vector.broadcast %53 : vector<1x1x128xf32> to vector<3x1x128xf32>
      %55 = arith.subf %54, %52 : vector<3x1x128xf32>
      %56 = vector.broadcast %51 : vector<3x1x128xf32> to vector<3x8x128xf32>
      %57 = arith.mulf %34, %56 : vector<3x8x128xf32>
      %58 = vector.broadcast %55 : vector<3x1x128xf32> to vector<3x8x128xf32>
      %59 = arith.addf %57, %58 : vector<3x8x128xf32>
      %cst_22 = arith.constant 0.000000e+00 : f32
      %60 = vector.broadcast %cst_22 : f32 to vector<3x8x128xf32>
      %61 = arith.maximumf %59, %60 : vector<3x8x128xf32>
      %62 = vector.shape_cast %61 : vector<3x8x128xf32> to vector<24x128xf32>
      %c0_23 = arith.constant 0 : index
      %c0_24 = arith.constant 0 : index
      %63 = vector.load %arg5[%c0_23, %c0_24] : memref<128x128xf32, #tpu.memory_space<vmem>>, vector<128x128xf32>
      %cst_25 = arith.constant dense<0.000000e+00> : vector<24x128xf32>
      %64 = tpu.matmul %62, %63, %cst_25 {dimension_numbers = #tpu.dot_dimension_numbers<[1], [0], [0], [1], [0, 0, 1, 1], [], []>} : vector<24x128xf32>, vector<128x128xf32>, vector<24x128xf32> -> vector<24x128xf32>
      %65 = vector.broadcast %20 : vector<1x128xf32> to vector<24x128xf32>
      %66 = arith.addf %64, %65 : vector<24x128xf32>
      %67 = vector.shape_cast %66 : vector<24x128xf32> to vector<3x8x128xf32>
      %cst_26 = arith.constant dense<0.000000e+00> : vector<3x128xf32>
      %68 = vector.multi_reduction <add>, %67, %cst_26 [1] : vector<3x8x128xf32> to vector<3x128xf32>
      %69 = vector.shape_cast %68 : vector<3x128xf32> to vector<3x1x128xf32>
      %cst_27 = arith.constant 1.250000e-01 : f32
      %70 = vector.broadcast %cst_27 : f32 to vector<3x1x128xf32>
      %71 = arith.mulf %69, %70 : vector<3x1x128xf32>
      %72 = arith.mulf %67, %67 : vector<3x8x128xf32>
      %cst_28 = arith.constant dense<0.000000e+00> : vector<3x128xf32>
      %73 = vector.multi_reduction <add>, %72, %cst_28 [1] : vector<3x8x128xf32> to vector<3x128xf32>
      %74 = vector.shape_cast %73 : vector<3x128xf32> to vector<3x1x128xf32>
      %cst_29 = arith.constant 1.250000e-01 : f32
      %75 = vector.broadcast %cst_29 : f32 to vector<3x1x128xf32>
      %76 = arith.mulf %74, %75 : vector<3x1x128xf32>
      %77 = arith.mulf %71, %71 : vector<3x1x128xf32>
      %78 = arith.subf %76, %77 : vector<3x1x128xf32>
      %cst_30 = arith.constant 9.99999974E-6 : f32
      %79 = vector.broadcast %cst_30 : f32 to vector<3x1x128xf32>
      %80 = arith.addf %78, %79 : vector<3x1x128xf32>
      %81 = math.rsqrt %80 : vector<3x1x128xf32>
      %82 = vector.shape_cast %21 : vector<1x128xf32> to vector<1x1x128xf32>
      %83 = vector.broadcast %82 : vector<1x1x128xf32> to vector<3x1x128xf32>
      %84 = arith.mulf %83, %81 : vector<3x1x128xf32>
      %85 = arith.mulf %71, %84 : vector<3x1x128xf32>
      %86 = vector.shape_cast %22 : vector<1x128xf32> to vector<1x1x128xf32>
      %87 = vector.broadcast %86 : vector<1x1x128xf32> to vector<3x1x128xf32>
      %88 = arith.subf %87, %85 : vector<3x1x128xf32>
      %89 = vector.broadcast %84 : vector<3x1x128xf32> to vector<3x8x128xf32>
      %90 = arith.mulf %67, %89 : vector<3x8x128xf32>
      %91 = vector.broadcast %88 : vector<3x1x128xf32> to vector<3x8x128xf32>
      %92 = arith.addf %90, %91 : vector<3x8x128xf32>
      %93 = arith.mulf %92, %92 : vector<3x8x128xf32>
      %cst_31 = arith.constant dense<0.000000e+00> : vector<3x8xf32>
      %94 = vector.multi_reduction <add>, %93, %cst_31 [2] : vector<3x8x128xf32> to vector<3x8xf32>
      %95 = vector.shape_cast %94 : vector<3x8xf32> to vector<3x8x1xf32>
      %cst_32 = arith.constant 1.000000e-24 : f32
      %96 = vector.broadcast %cst_32 : f32 to vector<3x8x1xf32>
      %97 = arith.maximumf %95, %96 : vector<3x8x1xf32>
      %98 = math.rsqrt %97 : vector<3x8x1xf32>
      %99 = vector.broadcast %98 : vector<3x8x1xf32> to vector<3x8x128xf32>
      %100 = arith.mulf %92, %99 : vector<3x8x128xf32>
      %101 = vector.extract_strided_slice %100 {offsets = [0, 0, 0], sizes = [1, 8, 128], strides = [1, 1, 1]} : vector<3x8x128xf32> to vector<1x8x128xf32>
      %102 = vector.shape_cast %101 : vector<1x8x128xf32> to vector<8x128xf32>
      %103 = vector.extract_strided_slice %100 {offsets = [1, 0, 0], sizes = [1, 8, 128], strides = [1, 1, 1]} : vector<3x8x128xf32> to vector<1x8x128xf32>
      %104 = vector.shape_cast %103 : vector<1x8x128xf32> to vector<8x128xf32>
      %105 = vector.extract_strided_slice %100 {offsets = [2, 0, 0], sizes = [1, 8, 128], strides = [1, 1, 1]} : vector<3x8x128xf32> to vector<1x8x128xf32>
      %106 = vector.shape_cast %105 : vector<1x8x128xf32> to vector<8x128xf32>
      %107 = arith.subf %102, %104 : vector<8x128xf32>
      %108 = arith.mulf %107, %107 : vector<8x128xf32>
      %cst_33 = arith.constant dense<0.000000e+00> : vector<8xf32>
      %109 = vector.multi_reduction <add>, %108, %cst_33 [1] : vector<8x128xf32> to vector<8xf32>
      %110 = vector.shape_cast %109 : vector<8xf32> to vector<8x1xf32>
      %111 = math.sqrt %110 : vector<8x1xf32>
      %112 = vector.shape_cast %111 : vector<8x1xf32> to vector<1x8x1xf32>
      %cst_34 = arith.constant dense<0.000000e+00> : vector<1xf32>
      %113 = vector.multi_reduction <add>, %112, %cst_34 [1, 2] : vector<1x8x1xf32> to vector<1xf32>
      %114 = vector.shape_cast %113 : vector<1xf32> to vector<1x1x1xf32>
      %115 = vector.extract %114[0, 0, 0] : f32 from vector<1x1x1xf32>
      %cst_35 = arith.constant 1.250000e-01 : f32
      %116 = arith.mulf %115, %cst_35 : f32
      %117 = arith.subf %102, %106 : vector<8x128xf32>
      %118 = arith.mulf %117, %117 : vector<8x128xf32>
      %cst_36 = arith.constant dense<0.000000e+00> : vector<8xf32>
      %119 = vector.multi_reduction <add>, %118, %cst_36 [1] : vector<8x128xf32> to vector<8xf32>
      %120 = vector.shape_cast %119 : vector<8xf32> to vector<8x1xf32>
      %121 = math.sqrt %120 : vector<8x1xf32>
      %122 = vector.shape_cast %121 : vector<8x1xf32> to vector<1x8x1xf32>
      %cst_37 = arith.constant dense<0.000000e+00> : vector<1xf32>
      %123 = vector.multi_reduction <add>, %122, %cst_37 [1, 2] : vector<1x8x1xf32> to vector<1xf32>
      %124 = vector.shape_cast %123 : vector<1xf32> to vector<1x1x1xf32>
      %125 = vector.extract %124[0, 0, 0] : f32 from vector<1x1x1xf32>
      %cst_38 = arith.constant 1.250000e-01 : f32
      %126 = arith.mulf %125, %cst_38 : f32
      %127 = arith.addf %116, %126 : f32
      %128 = arith.subf %104, %106 : vector<8x128xf32>
      %129 = arith.mulf %128, %128 : vector<8x128xf32>
      %cst_39 = arith.constant dense<0.000000e+00> : vector<8xf32>
      %130 = vector.multi_reduction <add>, %129, %cst_39 [1] : vector<8x128xf32> to vector<8xf32>
      %131 = vector.shape_cast %130 : vector<8xf32> to vector<8x1xf32>
      %132 = math.sqrt %131 : vector<8x1xf32>
      %133 = vector.shape_cast %132 : vector<8x1xf32> to vector<1x8x1xf32>
      %cst_40 = arith.constant dense<0.000000e+00> : vector<1xf32>
      %134 = vector.multi_reduction <add>, %133, %cst_40 [1, 2] : vector<1x8x1xf32> to vector<1xf32>
      %135 = vector.shape_cast %134 : vector<1xf32> to vector<1x1x1xf32>
      %136 = vector.extract %135[0, 0, 0] : f32 from vector<1x1x1xf32>
      %cst_41 = arith.constant 1.250000e-01 : f32
      %137 = arith.mulf %136, %cst_41 : f32
      %138 = arith.addf %127, %137 : f32
      %c0_42 = arith.constant 0 : index
      %139 = memref.load %arg8[%c0_42] : memref<1xf32, #tpu.memory_space<smem>>
      %cst_43 = arith.constant 4.8828125E-4 : f32
      %140 = arith.mulf %139, %cst_43 : f32
      %141 = arith.addf %140, %138 : f32
      %c0_44 = arith.constant 0 : index
      %c0_45 = arith.constant 0 : index
      %142 = memref.load %arg7[%c0_44, %c0_45] : memref<1x1xf32, #tpu.memory_space<smem>>
      memref.store %141, %arg7[%c0_44, %c0_45] : memref<1x1xf32, #tpu.memory_space<smem>>
    } else {
    }
    return
  }
  func.func @transform_0(%arg0: i32) -> (i32, i32) {
    %c0_i32 = arith.constant 0 : i32
    %c0_i32_0 = arith.constant 0 : i32
    return %arg0, %c0_i32 : i32, i32
  }
  func.func @transform_1(%arg0: i32) -> (i32, i32) {
    %c0_i32 = arith.constant 0 : i32
    %c0_i32_0 = arith.constant 0 : i32
    return %arg0, %c0_i32 : i32, i32
  }
  func.func @transform_2(%arg0: i32) -> (i32, i32) {
    %c0_i32 = arith.constant 0 : i32
    %c0_i32_0 = arith.constant 0 : i32
    %c0_i32_1 = arith.constant 0 : i32
    return %c0_i32, %c0_i32_0 : i32, i32
  }
  func.func @transform_3(%arg0: i32) -> (i32, i32) {
    %c0_i32 = arith.constant 0 : i32
    %c0_i32_0 = arith.constant 0 : i32
    %c0_i32_1 = arith.constant 0 : i32
    return %c0_i32, %c0_i32_0 : i32, i32
  }
  func.func @transform_4(%arg0: i32) -> (i32, i32) {
    %c0_i32 = arith.constant 0 : i32
    %c0_i32_0 = arith.constant 0 : i32
    %c0_i32_1 = arith.constant 0 : i32
    return %c0_i32, %c0_i32_0 : i32, i32
  }
  func.func @transform_5(%arg0: i32) -> (i32, i32) {
    %c0_i32 = arith.constant 0 : i32
    %c0_i32_0 = arith.constant 0 : i32
    %c0_i32_1 = arith.constant 0 : i32
    return %c0_i32, %c0_i32_0 : i32, i32
  }
  func.func @transform_6(%arg0: i32) -> (i32, i32) {
    %c0_i32 = arith.constant 0 : i32
    %c0_i32_0 = arith.constant 0 : i32
    %c0_i32_1 = arith.constant 0 : i32
    return %c0_i32, %c0_i32_0 : i32, i32
  }
}

</mosaic_0001>

<llo_original>
// kernel: tpu_custom_call.1
$region0: #{tpu_custom_call.1}
  #allocation0 [shape = 'u32[]', space=smem, size = 0x4, offset = 0x4, fixed_abs, tag = 'smem constant byte address 0x4 - core index']
  #allocation1 [shape = 'u32[144,128]{1,0:T(1,128)}', space=vmem, size = 0x12000, scoped, tag = 'internal scratch']
  #allocation2 [shape = 'f32[1]{0:T(128)}', space=smem, size = 0x200, scoped, tag = 'scratch operand']
  %s0 = inlined_call_operand.hbm [shape: f32[16,128], index: 0, kind: input, shape index: {}]
  %s1 = inlined_call_operand.hbm [shape: f32[16,128], index: 1, kind: input, shape index: {}]
  %s2 = inlined_call_operand.hbm [shape: f32[24,256], index: 2, kind: input, shape index: {}]
  %s3 = inlined_call_operand.hbm [shape: f32[256,128], index: 3, kind: input, shape index: {}]
  %s4 = inlined_call_operand.hbm [shape: f32[128,128], index: 4, kind: input, shape index: {}]
  %s5 = inlined_call_operand.vmem [shape: f32[8,128], index: 5, kind: input, shape index: {}]
  %s6 = inlined_call_operand.hbm [shape: f32[1,1], index: 6, kind: output, shape index: {}]
  %s7 = sld [smem:[#allocation0]]
  $region62: #{tpu_custom_call.1} parent=0
    _
  %s9 = ssub.s32 1, %s7
  %s10 = scalar_select 0, %s9, %s7
  $region1: #{tpu_custom_call.1} parent=0
    #allocation3 [shape = 'u8[8192]{0}', space=vmem, size = 0x2000, scoped, tag = 'input window, operand 0, single buffered']
    #allocation4 [shape = 's32[1]{0}', space=sflag, size = 0x4, scoped, tag = 'scoped memory for tpu_custom_call.1']
    #allocation5 [shape = 's32[1]{0}', space=sflag, size = 0x4, scoped, tag = 'scoped memory for tpu_custom_call.1']
    #allocation6 [shape = 'u8[8192]{0}', space=vmem, size = 0x2000, scoped, tag = 'input window, operand 1, single buffered']
    #allocation7 [shape = 's32[1]{0}', space=sflag, size = 0x4, scoped, tag = 'scoped memory for tpu_custom_call.1']
    #allocation8 [shape = 'u8[24576]{0}', space=vmem, size = 0x6000, scoped, tag = 'input window, operand 2, single buffered']
    #allocation9 [shape = 'u8[131072]{0}', space=vmem, size = 0x20000, scoped, tag = 'input window, operand 3, single buffered']
    #allocation10 [shape = 's32[1]{0}', space=sflag, size = 0x4, scoped, tag = 'scoped memory for tpu_custom_call.1']
    #allocation11 [shape = 'u8[65536]{0}', space=vmem, size = 0x10000, scoped, tag = 'input window, operand 4, single buffered']
    #allocation12 [shape = 'u8[512]{0}', space=smem, size = 0x200, scoped, tag = 'output window, operand 0, single buffered']
    %11 = vsyncpa [#allocation4], 0
    %12 = vsyncpa [#allocation7], 0
    %13 = vsyncpa [#allocation10], 0
    %14 = vsyncpa [#allocation5], 0
    // Predicated region
    $region2: #{tpu_custom_call.1} parent=1 // pred_check
      _
    $region3: #{tpu_custom_call.1} parent=1 // pred_check_branch
      %16 = sbr.rel (0) target = $region5
    $region4: #{tpu_custom_call.1} parent=1 // pred_region
      %s18 = ssub.s32 256, 256
      %19 = vsyncadd [#allocation4], %s18
      %s20 = sshll.u32 [#allocation3], 4
      %s21 = int_to_ptr.vmem [resolvable:$true] %s20
      %26 = dma.hbm_to_vmem [thread:$0]  %s0, 256, %s21, [#allocation4], 128, 128, 8
    $region5: #{tpu_custom_call.1} parent=1 // pred_fallthru
      _
    // Predicated region
    $region6: #{tpu_custom_call.1} parent=1 // pred_check
      _
    $region7: #{tpu_custom_call.1} parent=1 // pred_check_branch
      %28 = sbr.rel (0) target = $region9
    $region8: #{tpu_custom_call.1} parent=1 // pred_region
      %s30 = ssub.s32 256, 256
      %31 = vsyncadd [#allocation7], %s30
      %s32 = sshll.u32 [#allocation6], 4
      %s33 = int_to_ptr.vmem [resolvable:$true] %s32
      %38 = dma.hbm_to_vmem [thread:$0]  %s1, 256, %s33, [#allocation7], 128, 128, 8
    $region9: #{tpu_custom_call.1} parent=1 // pred_fallthru
      _
    // Predicated region
    $region10: #{tpu_custom_call.1} parent=1 // pred_check
      _
    $region11: #{tpu_custom_call.1} parent=1 // pred_check_branch
      %40 = sbr.rel (0) target = $region13
    $region12: #{tpu_custom_call.1} parent=1 // pred_region
      %s42 = ssub.s32 768, 768
      %43 = vsyncadd [#allocation7], %s42
      %s44 = sshll.u32 [#allocation8], 4
      %s45 = int_to_ptr.vmem [resolvable:$true] %s44
      %50 = dma.hbm_to_vmem [thread:$0]  %s2, 768, %s45, [#allocation7], 256, 256, 16
    $region13: #{tpu_custom_call.1} parent=1 // pred_fallthru
      _
    // Predicated region
    $region14: #{tpu_custom_call.1} parent=1 // pred_check
      _
    $region15: #{tpu_custom_call.1} parent=1 // pred_check_branch
      %52 = sbr.rel (0) target = $region17
    $region16: #{tpu_custom_call.1} parent=1 // pred_region
      %s54 = ssub.s32 4096, 4096
      %55 = vsyncadd [#allocation10], %s54
      %s56 = sshll.u32 [#allocation9], 4
      %s57 = int_to_ptr.vmem [resolvable:$true] %s56
      %62 = dma.hbm_to_vmem [thread:$0]  %s3, 4096, %s57, [#allocation10], 128, 128, 8
    $region17: #{tpu_custom_call.1} parent=1 // pred_fallthru
      _
    // Predicated region
    $region18: #{tpu_custom_call.1} parent=1 // pred_check
      _
    $region19: #{tpu_custom_call.1} parent=1 // pred_check_branch
      %64 = sbr.rel (0) target = $region21
    $region20: #{tpu_custom_call.1} parent=1 // pred_region
      %s66 = ssub.s32 2048, 2048
      %67 = vsyncadd [#allocation10], %s66
      %s68 = sshll.u32 [#allocation11], 4
      %s69 = int_to_ptr.vmem [resolvable:$true] %s68
      %74 = dma.hbm_to_vmem [thread:$0]  %s4, 2048, %s69, [#allocation10], 128, 128, 8
    $region21: #{tpu_custom_call.1} parent=1 // pred_fallthru
      _
    // Predicated region
    $region22: #{tpu_custom_call.1} parent=1 // pred_check
      _
    $region23: #{tpu_custom_call.1} parent=1 // pred_check_branch
      %76 = sbr.rel (0) target = $region25
    $region24: #{tpu_custom_call.1} parent=1 // pred_region
      _
    $region25: #{tpu_custom_call.1} parent=1 // pred_fallthru
      _
    // Predicated region
    $region26: #{tpu_custom_call.1} parent=1 // pred_check
      _
    $region27: #{tpu_custom_call.1} parent=1 // pred_check_branch
      %78 = sbr.rel (0) target = $region29
    $region28: #{tpu_custom_call.1} parent=1 // pred_region
      %79 = dma.done [#allocation4], 256
    $region29: #{tpu_custom_call.1} parent=1 // pred_fallthru
      _
    // Predicated region
    $region30: #{tpu_custom_call.1} parent=1 // pred_check
      _
    $region31: #{tpu_custom_call.1} parent=1 // pred_check_branch
      %81 = sbr.rel (0) target = $region33
    $region32: #{tpu_custom_call.1} parent=1 // pred_region
      %82 = dma.done [#allocation7], 256
    $region33: #{tpu_custom_call.1} parent=1 // pred_fallthru
      _
    // Predicated region
    $region34: #{tpu_custom_call.1} parent=1 // pred_check
      _
    $region35: #{tpu_custom_call.1} parent=1 // pred_check_branch
      %84 = sbr.rel (0) target = $region37
    $region36: #{tpu_custom_call.1} parent=1 // pred_region
      %85 = dma.done [#allocation7], 768
    $region37: #{tpu_custom_call.1} parent=1 // pred_fallthru
      _
    // Predicated region
    $region38: #{tpu_custom_call.1} parent=1 // pred_check
      _
    $region39: #{tpu_custom_call.1} parent=1 // pred_check_branch
      %87 = sbr.rel (0) target = $region41
    $region40: #{tpu_custom_call.1} parent=1 // pred_region
      %88 = dma.done [#allocation10], 4096
    $region41: #{tpu_custom_call.1} parent=1 // pred_fallthru
      _
    // Predicated region
    $region42: #{tpu_custom_call.1} parent=1 // pred_check
      _
    $region43: #{tpu_custom_call.1} parent=1 // pred_check_branch
      %90 = sbr.rel (0) target = $region45
    $region44: #{tpu_custom_call.1} parent=1 // pred_region
      %91 = dma.done [#allocation10], 2048
    $region45: #{tpu_custom_call.1} parent=1 // pred_fallthru
      _
    %p92 = scmp.eq.s32.totalorder 0, 0
    // Predicated region
    $region46: #{tpu_custom_call.1} parent=1 // pred_check
      %p93 = pneg %p92
    $region47: #{tpu_custom_call.1} parent=1 // pred_check_branch
      %95 = sbr.rel (%p93) target = $region49
    $region48: #{tpu_custom_call.1} parent=1 // pred_region
      %s96 = scalar_lea.smem [#allocation2], 0
      %97 = sst [smem:[%s96]] 0.0
    $region49: #{tpu_custom_call.1} parent=1 // pred_fallthru
      _
    %v98 = vld [vmem:[#allocation3] sm:$0xff]
    %v99 = vld [vmem:[#allocation3 + $0x8] sm:$0xff]
    %v100 = vld [vmem:[#allocation6] sm:$0xff]
    %v101 = vld [vmem:[#allocation6 + $0x8] sm:$0xff]
    %v102 = vsub.f32 %v98, %v100
    %v103 = vsub.f32 %v99, %v101
    %s104 = sld [smem:[#allocation2]]
    %v105 = vmul.f32 %v102, %v102
    %v106 = vmul.f32 %v103, %v103
    %v107 = vadd.f32 %v105, %v106
    %108 = vadd.xlane.f32.xlu0 %v107
    %v109 = vpop.xlane.xlu0 %108
    %v110 = vrot.slane %v109, 4
    %v111 = vadd.f32 %v109, %v110
    %v112 = vrot.slane %v111, 2
    %v113 = vadd.f32 %v111, %v112
    %v114 = vrot.slane %v113, 1
    %v115 = vadd.f32 %v113, %v114
    %s116 = vtos %v115
    %s117 = sadd.f32 %s104, %s116
    %s118 = scalar_lea.smem [#allocation2], 0
    %119 = sst [smem:[%s118]] %s117
    // Predicated region
    $region50: #{tpu_custom_call.1} parent=1 // pred_check
      %p120 = pneg %p92
    $region51: #{tpu_custom_call.1} parent=1 // pred_check_branch
      %122 = sbr.rel (%p120) target = $region53
    $region52: #{tpu_custom_call.1} parent=1 // pred_region
      %v123 = vld [vmem:[%s5] sm:$0xff]
      %v124 = vld [vmem:[#allocation8] sm:$0xff]
      %v125 = vld [vmem:[#allocation8 + $0x8] sm:$0xff]
      %v126 = vld [vmem:[#allocation8 + $0x10] sm:$0xff]
      %v127 = vld [vmem:[#allocation8 + $0x18] sm:$0xff]
      %v128 = vld [vmem:[#allocation8 + $0x20] sm:$0xff]
      %v129 = vld [vmem:[#allocation8 + $0x28] sm:$0xff]
      %v130 = vmul.f32 %v124, %v124
      %v131 = vmul.f32 %v125, %v125
      %v132 = vmul.f32 %v126, %v126
      %v133 = vmul.f32 %v127, %v127
      %v134 = vmul.f32 %v128, %v128
      %v135 = vmul.f32 %v129, %v129
      %v136 = vadd.f32 %v130, %v131
      %137 = vadd.xlane.f32.xlu0 %v136
      %v138 = vpop.xlane.xlu0 %137
      %v139 = vadd.f32 %v132, %v133
      %140 = vadd.xlane.f32.xlu0 %v139
      %v141 = vpop.xlane.xlu0 %140
      %v142 = vadd.f32 %v134, %v135
      %143 = vadd.xlane.f32.xlu0 %v142
      %v144 = vpop.xlane.xlu0 %143
      %v145 = vmax.f32 %v138, 1e-24
      %v146 = vmax.f32 %v141, 1e-24
      %v147 = vmax.f32 %v144, 1e-24
      %v148 = vrsqrt.pop %v145
      %v149 = vrsqrt.pop %v146
      %v150 = vrsqrt.pop %v147
      %v151 = vmul.f32 %v124, %v148
      %v152 = vmul.f32 %v125, %v148
      %v153 = vmul.f32 %v126, %v149
      %v154 = vmul.f32 %v127, %v149
      %v155 = vmul.f32 %v128, %v150
      %v156 = vmul.f32 %v129, %v150
      %v157 = vld [vmem:[#allocation9] sm:$0xff]
      %v158 = vld [vmem:[#allocation9 + $0x8] sm:$0xff]
      %v159 = vld [vmem:[#allocation9 + $0x10] sm:$0xff]
      %v160 = vld [vmem:[#allocation9 + $0x18] sm:$0xff]
      %v161 = vld [vmem:[#allocation9 + $0x20] sm:$0xff]
      %v162 = vld [vmem:[#allocation9 + $0x28] sm:$0xff]
      %v163 = vld [vmem:[#allocation9 + $0x30] sm:$0xff]
      %v164 = vld [vmem:[#allocation9 + $0x38] sm:$0xff]
      %v165 = vld [vmem:[#allocation9 + $0x40] sm:$0xff]
      %v166 = vld [vmem:[#allocation9 + $0x48] sm:$0xff]
      %v167 = vld [vmem:[#allocation9 + $0x50] sm:$0xff]
      %v168 = vld [vmem:[#allocation9 + $0x58] sm:$0xff]
      %v169 = vld [vmem:[#allocation9 + $0x60] sm:$0xff]
      %v170 = vld [vmem:[#allocation9 + $0x68] sm:$0xff]
      %v171 = vld [vmem:[#allocation9 + $0x70] sm:$0xff]
      %v172 = vld [vmem:[#allocation9 + $0x78] sm:$0xff]
      %v173 = vld [vmem:[#allocation9 + $0x80] sm:$0xff]
      %v174 = vld [vmem:[#allocation9 + $0x88] sm:$0xff]
      %v175 = vld [vmem:[#allocation9 + $0x90] sm:$0xff]
      %v176 = vld [vmem:[#allocation9 + $0x98] sm:$0xff]
      %v177 = vld [vmem:[#allocation9 + $0xa0] sm:$0xff]
      %v178 = vld [vmem:[#allocation9 + $0xa8] sm:$0xff]
      %v179 = vld [vmem:[#allocation9 + $0xb0] sm:$0xff]
      %v180 = vld [vmem:[#allocation9 + $0xb8] sm:$0xff]
      %v181 = vld [vmem:[#allocation9 + $0xc0] sm:$0xff]
      %v182 = vld [vmem:[#allocation9 + $0xc8] sm:$0xff]
      %v183 = vld [vmem:[#allocation9 + $0xd0] sm:$0xff]
      %v184 = vld [vmem:[#allocation9 + $0xd8] sm:$0xff]
      %v185 = vld [vmem:[#allocation9 + $0xe0] sm:$0xff]
      %v186 = vld [vmem:[#allocation9 + $0xe8] sm:$0xff]
      %v187 = vld [vmem:[#allocation9 + $0xf0] sm:$0xff]
      %v188 = vld [vmem:[#allocation9 + $0xf8] sm:$0xff]
      %189 = vmatprep.subr.mxu0 0.0
      %190 = vmatpush1.msra.mxu0 %v157
      %191 = vmatprep.subr.mxu0 0.0
      %192 = vmatpush1.msra.mxu0 %v158
      %193 = vmatprep.subr.mxu0 0.0
      %194 = vmatpush1.msra.mxu0 %v159
      %195 = vmatprep.subr.mxu0 0.0
      %196 = vmatpush1.msra.mxu0 %v160
      %197 = vmatprep.subr.mxu0 0.0
      %198 = vmatpush1.msra.mxu0 %v161
      %199 = vmatprep.subr.mxu0 0.0
      %200 = vmatpush1.msra.mxu0 %v162
      %201 = vmatprep.subr.mxu0 0.0
      %202 = vmatpush1.msra.mxu0 %v163
      %203 = vmatprep.subr.mxu0 0.0
      %204 = vmatpush1.msra.mxu0 %v164
      %205 = vmatprep.subr.mxu0 0.0
      %206 = vmatpush1.msra.mxu0 %v165
      %207 = vmatprep.subr.mxu0 0.0
      %208 = vmatpush1.msra.mxu0 %v166
      %209 = vmatprep.subr.mxu0 0.0
      %210 = vmatpush1.msra.mxu0 %v167
      %211 = vmatprep.subr.mxu0 0.0
      %212 = vmatpush1.msra.mxu0 %v168
      %213 = vmatprep.subr.mxu0 0.0
      %214 = vmatpush1.msra.mxu0 %v169
      %215 = vmatprep.subr.mxu0 0.0
      %216 = vmatpush1.msra.mxu0 %v170
      %217 = vmatprep.subr.mxu0 0.0
      %218 = vmatpush1.msra.mxu0 %v171
      %219 = vmatprep.subr.mxu0 0.0
      %220 = vmatpush1.msra.mxu0 %v172
      %221 = vmatprep.subr.mxu0 0.0
      %222 = vmatpush1.msra.mxu0 %v173
      %223 = vmatprep.subr.mxu0 0.0
      %224 = vmatpush1.msra.mxu0 %v174
      %225 = vmatprep.subr.mxu0 0.0
      %226 = vmatpush1.msra.mxu0 %v175
      %227 = vmatprep.subr.mxu0 0.0
      %228 = vmatpush1.msra.mxu0 %v176
      %229 = vmatprep.subr.mxu0 0.0
      %230 = vmatpush1.msra.mxu0 %v177
      %231 = vmatprep.subr.mxu0 0.0
      %232 = vmatpush1.msra.mxu0 %v178
      %233 = vmatprep.subr.mxu0 0.0
      %234 = vmatpush1.msra.mxu0 %v179
      %235 = vmatprep.subr.mxu0 0.0
      %236 = vmatpush1.msra.mxu0 %v180
      %237 = vmatprep.subr.mxu0 0.0
      %238 = vmatpush1.msra.mxu0 %v181
      %239 = vmatprep.subr.mxu0 0.0
      %240 = vmatpush1.msra.mxu0 %v182
      %241 = vmatprep.subr.mxu0 0.0
      %242 = vmatpush1.msra.mxu0 %v183
      %243 = vmatprep.subr.mxu0 0.0
      %244 = vmatpush1.msra.mxu0 %v184
      %245 = vmatprep.subr.mxu0 0.0
      %246 = vmatpush1.msra.mxu0 %v185
      %247 = vmatprep.subr.mxu0 0.0
      %248 = vmatpush1.msra.mxu0 %v186
      %249 = vmatprep.subr.mxu0 0.0
      %250 = vmatpush1.msra.mxu0 %v187
      %251 = vmatprep.subr.mxu0 0.0
      %252 = vmatpush1.msra.mxu0 %v188
      %253 = vmatprep.mubr.f32.mxu0 %v152
      %254 = vmatmul.mubr.f32.gmra.mrb[0].mxu0 %v151
      %v255 = vpop.f32.mrb[0].mxu0
      %v256 = vadd.f32 0.0, %v255
      %v257 = vpop.f32.mrb[0].mxu0
      %258 = vmatprep.mubr.f32.mxu0 %v154
      %259 = vmatmul.mubr.f32.gmra.mrb[0].mxu0 %v153
      %v260 = vpop.f32.mrb[0].mxu0
      %v261 = vadd.f32 0.0, %v260
      %v262 = vpop.f32.mrb[0].mxu0
      %263 = vmatprep.mubr.f32.mxu0 %v156
      %264 = vmatmul.mubr.f32.gmra.mrb[0].mxu0 %v155
      %v265 = vpop.f32.mrb[0].mxu0
      %v266 = vadd.f32 0.0, %v265
      %v267 = vpop.f32.mrb[0].mxu0
      %268 = vdwg.mxu0
      %v269 = vrot.slane %v256, 4
      %v270 = vadd.f32 %v256, %v269
      %v271 = vrot.slane %v270, 2
      %v272 = vadd.f32 %v270, %v271
      %v273 = vrot.slane %v272, 1
      %v274 = vadd.f32 %v272, %v273
      %v275 = vrot.slane %v261, 4
      %v276 = vadd.f32 %v261, %v275
      %v277 = vrot.slane %v276, 2
      %v278 = vadd.f32 %v276, %v277
      %v279 = vrot.slane %v278, 1
      %v280 = vadd.f32 %v278, %v279
      %v281 = vrot.slane %v266, 4
      %v282 = vadd.f32 %v266, %v281
      %v283 = vrot.slane %v282, 2
      %v284 = vadd.f32 %v282, %v283
      %v285 = vrot.slane %v284, 1
      %v286 = vadd.f32 %v284, %v285
      %v287 = vmul.f32 %v274, 0.125
      %v288 = vmul.f32 %v280, 0.125
      %v289 = vmul.f32 %v286, 0.125
      %v290 = vmul.f32 %v256, %v256
      %v291 = vmul.f32 %v261, %v261
      %v292 = vmul.f32 %v266, %v266
      %v293 = vrot.slane %v290, 4
      %v294 = vadd.f32 %v290, %v293
      %v295 = vrot.slane %v294, 2
      %v296 = vadd.f32 %v294, %v295
      %v297 = vrot.slane %v296, 1
      %v298 = vadd.f32 %v296, %v297
      %v299 = vrot.slane %v291, 4
      %v300 = vadd.f32 %v291, %v299
      %v301 = vrot.slane %v300, 2
      %v302 = vadd.f32 %v300, %v301
      %v303 = vrot.slane %v302, 1
      %v304 = vadd.f32 %v302, %v303
      %v305 = vrot.slane %v292, 4
      %v306 = vadd.f32 %v292, %v305
      %v307 = vrot.slane %v306, 2
      %v308 = vadd.f32 %v306, %v307
      %v309 = vrot.slane %v308, 1
      %v310 = vadd.f32 %v308, %v309
      %v311 = vmul.f32 %v298, 0.125
      %v312 = vmul.f32 %v304, 0.125
      %v313 = vmul.f32 %v310, 0.125
      %v314 = vmul.f32 %v287, %v287
      %v315 = vmul.f32 %v288, %v288
      %v316 = vmul.f32 %v289, %v289
      %v317 = vsub.f32 %v311, %v314
      %v318 = vsub.f32 %v312, %v315
      %v319 = vsub.f32 %v313, %v316
      %v320 = vadd.f32 %v317, 1e-05
      %v321 = vadd.f32 %v318, 1e-05
      %v322 = vadd.f32 %v319, 1e-05
      %v323 = vrsqrt.pop %v320
      %v324 = vrsqrt.pop %v321
      %v325 = vrsqrt.pop %v322
      %v326 = vmul.f32 %v123, %v323
      %v327 = vmul.f32 %v123, %v324
      %v328 = vmul.f32 %v123, %v325
      %v329 = vmul.f32 %v287, %v326
      %v330 = vmul.f32 %v288, %v327
      %v331 = vmul.f32 %v289, %v328
      %v335 = vrot.slane %v329, 7
      %v336 = vrot.slane %v330, 7
      %v337 = vrot.slane %v331, 7
      %v341 = vsub.f32 %v123, %v335
      %v342 = vsub.f32 %v123, %v336
      %v343 = vsub.f32 %v123, %v337
      %v344 = vlaneseq
      %v345 = vshrl.u32 %v344, 7
      %v346 = vsub.s32 0, %v345
      %v347 = vrot.slane %v326, %v346
      %v348 = vlaneseq
      %v349 = vshrl.u32 %v348, 7
      %v350 = vsub.s32 0, %v349
      %v351 = vrot.slane %v327, %v350
      %v352 = vlaneseq
      %v353 = vshrl.u32 %v352, 7
      %v354 = vsub.s32 0, %v353
      %v355 = vrot.slane %v328, %v354
      %v356 = vmul.f32 %v256, %v347
      %v357 = vmul.f32 %v261, %v351
      %v358 = vmul.f32 %v266, %v355
      %v359 = vlaneseq
      %v360 = vshrl.u32 %v359, 7
      %v361 = vsub.s32 1, %v360
      %v362 = vrot.slane %v341, %v361
      %v363 = vlaneseq
      %v364 = vshrl.u32 %v363, 7
      %v365 = vsub.s32 1, %v364
      %v366 = vrot.slane %v342, %v365
      %v367 = vlaneseq
      %v368 = vshrl.u32 %v367, 7
      %v369 = vsub.s32 1, %v368
      %v370 = vrot.slane %v343, %v369
      %v371 = vadd.f32 %v356, %v362
      %v372 = vadd.f32 %v357, %v366
      %v373 = vadd.f32 %v358, %v370
      %v374 = vmax.f32 %v371, 0.0
      %v375 = vmax.f32 %v372, 0.0
      %v376 = vmax.f32 %v373, 0.0
      %v377 = vld [vmem:[#allocation11] sm:$0xff]
      %v378 = vld [vmem:[#allocation11 + $0x8] sm:$0xff]
      %v379 = vld [vmem:[#allocation11 + $0x10] sm:$0xff]
      %v380 = vld [vmem:[#allocation11 + $0x18] sm:$0xff]
      %v381 = vld [vmem:[#allocation11 + $0x20] sm:$0xff]
      %v382 = vld [vmem:[#allocation11 + $0x28] sm:$0xff]
      %v383 = vld [vmem:[#allocation11 + $0x30] sm:$0xff]
      %v384 = vld [vmem:[#allocation11 + $0x38] sm:$0xff]
      %v385 = vld [vmem:[#allocation11 + $0x40] sm:$0xff]
      %v386 = vld [vmem:[#allocation11 + $0x48] sm:$0xff]
      %v387 = vld [vmem:[#allocation11 + $0x50] sm:$0xff]
      %v388 = vld [vmem:[#allocation11 + $0x58] sm:$0xff]
      %v389 = vld [vmem:[#allocation11 + $0x60] sm:$0xff]
      %v390 = vld [vmem:[#allocation11 + $0x68] sm:$0xff]
      %v391 = vld [vmem:[#allocation11 + $0x70] sm:$0xff]
      %v392 = vld [vmem:[#allocation11 + $0x78] sm:$0xff]
      %v393 = vlaneseq
      %v394 = vshrl.u32 %v393, 7
      %v395 = vsub.s32 2, %v394
      %v396 = vrot.slane %v123, %v395
      %397 = vmatprep.subr.mxu0 0.0
      %398 = vmatpush1.msra.mxu0 %v377
      %399 = vmatprep.subr.mxu0 0.0
      %400 = vmatpush1.msra.mxu0 %v378
      %401 = vmatprep.subr.mxu0 0.0
      %402 = vmatpush1.msra.mxu0 %v379
      %403 = vmatprep.subr.mxu0 0.0
      %404 = vmatpush1.msra.mxu0 %v380
      %405 = vmatprep.subr.mxu0 0.0
      %406 = vmatpush1.msra.mxu0 %v381
      %407 = vmatprep.subr.mxu0 0.0
      %408 = vmatpush1.msra.mxu0 %v382
      %409 = vmatprep.subr.mxu0 0.0
      %410 = vmatpush1.msra.mxu0 %v383
      %411 = vmatprep.subr.mxu0 0.0
      %412 = vmatpush1.msra.mxu0 %v384
      %413 = vmatprep.subr.mxu0 0.0
      %414 = vmatpush1.msra.mxu0 %v385
      %415 = vmatprep.subr.mxu0 0.0
      %416 = vmatpush1.msra.mxu0 %v386
      %417 = vmatprep.subr.mxu0 0.0
      %418 = vmatpush1.msra.mxu0 %v387
      %419 = vmatprep.subr.mxu0 0.0
      %420 = vmatpush1.msra.mxu0 %v388
      %421 = vmatprep.subr.mxu0 0.0
      %422 = vmatpush1.msra.mxu0 %v389
      %423 = vmatprep.subr.mxu0 0.0
      %424 = vmatpush1.msra.mxu0 %v390
      %425 = vmatprep.subr.mxu0 0.0
      %426 = vmatpush1.msra.mxu0 %v391
      %427 = vmatprep.subr.mxu0 0.0
      %428 = vmatpush1.msra.mxu0 %v392
      %429 = vmatprep.subr.mxu0 0.0
      %430 = vmatpush1.msra.mxu0 0.0
      %431 = vmatprep.subr.mxu0 0.0
      %432 = vmatpush1.msra.mxu0 0.0
      %433 = vmatprep.subr.mxu0 0.0
      %434 = vmatpush1.msra.mxu0 0.0
      %435 = vmatprep.subr.mxu0 0.0
      %436 = vmatpush1.msra.mxu0 0.0
      %437 = vmatprep.subr.mxu0 0.0
      %438 = vmatpush1.msra.mxu0 0.0
      %439 = vmatprep.subr.mxu0 0.0
      %440 = vmatpush1.msra.mxu0 0.0
      %441 = vmatprep.subr.mxu0 0.0
      %442 = vmatpush1.msra.mxu0 0.0
      %443 = vmatprep.subr.mxu0 0.0
      %444 = vmatpush1.msra.mxu0 0.0
      %445 = vmatprep.subr.mxu0 0.0
      %446 = vmatpush1.msra.mxu0 0.0
      %447 = vmatprep.subr.mxu0 0.0
      %448 = vmatpush1.msra.mxu0 0.0
      %449 = vmatprep.subr.mxu0 0.0
      %450 = vmatpush1.msra.mxu0 0.0
      %451 = vmatprep.subr.mxu0 0.0
      %452 = vmatpush1.msra.mxu0 0.0
      %453 = vmatprep.subr.mxu0 0.0
      %454 = vmatpush1.msra.mxu0 0.0
      %455 = vmatprep.subr.mxu0 0.0
      %456 = vmatpush1.msra.mxu0 0.0
      %457 = vmatprep.subr.mxu0 0.0
      %458 = vmatpush1.msra.mxu0 0.0
      %459 = vmatprep.subr.mxu0 0.0
      %460 = vmatpush1.msra.mxu0 0.0
      %461 = vmatprep.mubr.f32.mxu0 0.0
      %462 = vmatmul.mubr.f32.gmra.mrb[0].mxu0 %v374
      %v463 = vpop.f32.mrb[0].mxu0
      %v464 = vadd.f32 %v396, %v463
      %v465 = vpop.f32.mrb[0].mxu0
      %466 = vmatprep.mubr.f32.mxu0 0.0
      %467 = vmatmul.mubr.f32.gmra.mrb[0].mxu0 %v375
      %v468 = vpop.f32.mrb[0].mxu0
      %v469 = vadd.f32 %v396, %v468
      %v470 = vpop.f32.mrb[0].mxu0
      %471 = vmatprep.mubr.f32.mxu0 0.0
      %472 = vmatmul.mubr.f32.gmra.mrb[0].mxu0 %v376
      %v473 = vpop.f32.mrb[0].mxu0
      %v474 = vadd.f32 %v396, %v473
      %v475 = vpop.f32.mrb[0].mxu0
      %476 = vdwg.mxu0
      %v477 = vrot.slane %v464, 4
      %v478 = vadd.f32 %v464, %v477
      %v479 = vrot.slane %v478, 2
      %v480 = vadd.f32 %v478, %v479
      %v481 = vrot.slane %v480, 1
      %v482 = vadd.f32 %v480, %v481
      %v483 = vrot.slane %v469, 4
      %v484 = vadd.f32 %v469, %v483
      %v485 = vrot.slane %v484, 2
      %v486 = vadd.f32 %v484, %v485
      %v487 = vrot.slane %v486, 1
      %v488 = vadd.f32 %v486, %v487
      %v489 = vrot.slane %v474, 4
      %v490 = vadd.f32 %v474, %v489
      %v491 = vrot.slane %v490, 2
      %v492 = vadd.f32 %v490, %v491
      %v493 = vrot.slane %v492, 1
      %v494 = vadd.f32 %v492, %v493
      %v495 = vmul.f32 %v482, 0.125
      %v496 = vmul.f32 %v488, 0.125
      %v497 = vmul.f32 %v494, 0.125
      %v498 = vmul.f32 %v464, %v464
      %v499 = vmul.f32 %v469, %v469
      %v500 = vmul.f32 %v474, %v474
      %v501 = vrot.slane %v498, 4
      %v502 = vadd.f32 %v498, %v501
      %v503 = vrot.slane %v502, 2
      %v504 = vadd.f32 %v502, %v503
      %v505 = vrot.slane %v504, 1
      %v506 = vadd.f32 %v504, %v505
      %v507 = vrot.slane %v499, 4
      %v508 = vadd.f32 %v499, %v507
      %v509 = vrot.slane %v508, 2
      %v510 = vadd.f32 %v508, %v509
      %v511 = vrot.slane %v510, 1
      %v512 = vadd.f32 %v510, %v511
      %v513 = vrot.slane %v500, 4
      %v514 = vadd.f32 %v500, %v513
      %v515 = vrot.slane %v514, 2
      %v516 = vadd.f32 %v514, %v515
      %v517 = vrot.slane %v516, 1
      %v518 = vadd.f32 %v516, %v517
      %v519 = vmul.f32 %v506, 0.125
      %v520 = vmul.f32 %v512, 0.125
      %v521 = vmul.f32 %v518, 0.125
      %v522 = vmul.f32 %v495, %v495
      %v523 = vmul.f32 %v496, %v496
      %v524 = vmul.f32 %v497, %v497
      %v525 = vsub.f32 %v519, %v522
      %v526 = vsub.f32 %v520, %v523
      %v527 = vsub.f32 %v521, %v524
      %v528 = vadd.f32 %v525, 1e-05
      %v529 = vadd.f32 %v526, 1e-05
      %v530 = vadd.f32 %v527, 1e-05
      %v531 = vrsqrt.pop %v528
      %v532 = vrsqrt.pop %v529
      %v533 = vrsqrt.pop %v530
      %v534 = vmul.f32 %v123, %v531
      %v535 = vmul.f32 %v123, %v532
      %v536 = vmul.f32 %v123, %v533
      %v537 = vmul.f32 %v495, %v534
      %v538 = vmul.f32 %v496, %v535
      %v539 = vmul.f32 %v497, %v536
      %v543 = vrot.slane %v537, 7
      %v544 = vrot.slane %v538, 7
      %v545 = vrot.slane %v539, 7
      %v549 = vsub.f32 %v123, %v543
      %v550 = vsub.f32 %v123, %v544
      %v551 = vsub.f32 %v123, %v545
      %v552 = vlaneseq
      %v553 = vshrl.u32 %v552, 7
      %v554 = vsub.s32 3, %v553
      %v555 = vrot.slane %v534, %v554
      %v556 = vlaneseq
      %v557 = vshrl.u32 %v556, 7
      %v558 = vsub.s32 3, %v557
      %v559 = vrot.slane %v535, %v558
      %v560 = vlaneseq
      %v561 = vshrl.u32 %v560, 7
      %v562 = vsub.s32 3, %v561
      %v563 = vrot.slane %v536, %v562
      %v564 = vmul.f32 %v464, %v555
      %v565 = vmul.f32 %v469, %v559
      %v566 = vmul.f32 %v474, %v563
      %v567 = vlaneseq
      %v568 = vshrl.u32 %v567, 7
      %v569 = vsub.s32 4, %v568
      %v570 = vrot.slane %v549, %v569
      %v571 = vlaneseq
      %v572 = vshrl.u32 %v571, 7
      %v573 = vsub.s32 4, %v572
      %v574 = vrot.slane %v550, %v573
      %v575 = vlaneseq
      %v576 = vshrl.u32 %v575, 7
      %v577 = vsub.s32 4, %v576
      %v578 = vrot.slane %v551, %v577
      %v579 = vadd.f32 %v564, %v570
      %v580 = vadd.f32 %v565, %v574
      %v581 = vadd.f32 %v566, %v578
      %v582 = vmul.f32 %v579, %v579
      %v583 = vmul.f32 %v580, %v580
      %v584 = vmul.f32 %v581, %v581
      %585 = vadd.xlane.f32.xlu0 %v582
      %v586 = vpop.xlane.xlu0 %585
      %587 = vadd.xlane.f32.xlu0 %v583
      %v588 = vpop.xlane.xlu0 %587
      %589 = vadd.xlane.f32.xlu0 %v584
      %v590 = vpop.xlane.xlu0 %589
      %v591 = vmax.f32 %v586, 1e-24
      %v592 = vmax.f32 %v588, 1e-24
      %v593 = vmax.f32 %v590, 1e-24
      %v594 = vrsqrt.pop %v591
      %v595 = vrsqrt.pop %v592
      %v596 = vrsqrt.pop %v593
      %v597 = vmul.f32 %v579, %v594
      %v598 = vmul.f32 %v580, %v595
      %v599 = vmul.f32 %v581, %v596
      %v600 = vsub.f32 %v597, %v598
      %v601 = vmul.f32 %v600, %v600
      %602 = vadd.xlane.f32.xlu0 %v601
      %v603 = vpop.xlane.xlu0 %602
      %v604 = vrsqrt.pop %v603
      %v605 = vmul.f32 %v603, %v604
      %vm606 = vcmp.eq.f32.partialorder %v603, inf
      %v607 = vsel %vm606, %v603, %v605
      %vm608 = vcmp.eq.f32.partialorder %v603, 0.0
      %v609 = vand.u32 %v603, 2147483648
      %v610 = vsel %vm608, %v609, %v607
      %vm611 = vcmask 7168
      %v612 = vsel %vm611, %v610, 0.0
      %613 = vadd.xlane.f32.xlu0 %v612
      %v614 = vpop.xlane.xlu0 %613
      %v615 = vrot.slane %v614, 4
      %v616 = vadd.f32 %v614, %v615
      %v617 = vrot.slane %v616, 2
      %v618 = vadd.f32 %v616, %v617
      %v619 = vrot.slane %v618, 1
      %v620 = vadd.f32 %v618, %v619
      %s621 = vtos %v620
      %s622 = smul.f32 %s621, 0.125
      %v623 = vsub.f32 %v597, %v599
      %v624 = vmul.f32 %v623, %v623
      %625 = vadd.xlane.f32.xlu0 %v624
      %v626 = vpop.xlane.xlu0 %625
      %v627 = vrsqrt.pop %v626
      %v628 = vmul.f32 %v626, %v627
      %vm629 = vcmp.eq.f32.partialorder %v626, inf
      %v630 = vsel %vm629, %v626, %v628
      %vm631 = vcmp.eq.f32.partialorder %v626, 0.0
      %v632 = vand.u32 %v626, 2147483648
      %v633 = vsel %vm631, %v632, %v630
      %v634 = vsel %vm611, %v633, 0.0
      %635 = vadd.xlane.f32.xlu0 %v634
      %v636 = vpop.xlane.xlu0 %635
      %v637 = vrot.slane %v636, 4
      %v638 = vadd.f32 %v636, %v637
      %v639 = vrot.slane %v638, 2
      %v640 = vadd.f32 %v638, %v639
      %v641 = vrot.slane %v640, 1
      %v642 = vadd.f32 %v640, %v641
      %s643 = vtos %v642
      %s644 = smul.f32 %s643, 0.125
      %s645 = sadd.f32 %s622, %s644
      %v646 = vsub.f32 %v598, %v599
      %v647 = vmul.f32 %v646, %v646
      %648 = vadd.xlane.f32.xlu0 %v647
      %v649 = vpop.xlane.xlu0 %648
      %v650 = vrsqrt.pop %v649
      %v651 = vmul.f32 %v649, %v650
      %vm652 = vcmp.eq.f32.partialorder %v649, inf
      %v653 = vsel %vm652, %v649, %v651
      %vm654 = vcmp.eq.f32.partialorder %v649, 0.0
      %v655 = vand.u32 %v649, 2147483648
      %v656 = vsel %vm654, %v655, %v653
      %v657 = vsel %vm611, %v656, 0.0
      %658 = vadd.xlane.f32.xlu0 %v657
      %v659 = vpop.xlane.xlu0 %658
      %v660 = vrot.slane %v659, 4
      %v661 = vadd.f32 %v659, %v660
      %v662 = vrot.slane %v661, 2
      %v663 = vadd.f32 %v661, %v662
      %v664 = vrot.slane %v663, 1
      %v665 = vadd.f32 %v663, %v664
      %s666 = vtos %v665
      %s667 = smul.f32 %s666, 0.125
      %s668 = sadd.f32 %s645, %s667
      %s669 = sld [smem:[#allocation2]]
      %s670 = smul.f32 %s669, 0.00048828125
      %s671 = sadd.f32 %s670, %s668
      %s672 = scalar_lea.smem [#allocation12], 0
      %673 = sst [smem:[%s672]] %s671
    $region53: #{tpu_custom_call.1} parent=1 // pred_fallthru
      _
    // Predicated region
    $region54: #{tpu_custom_call.1} parent=1 // pred_check
      _
    $region55: #{tpu_custom_call.1} parent=1 // pred_check_branch
      %675 = sbr.rel (0) target = $region57
    $region56: #{tpu_custom_call.1} parent=1 // pred_region
      %s677 = ssub.s32 16, 16
      %678 = vsyncadd [#allocation5], %s677
      %681 = dma.smem_to_hbm [#allocation12], 16, %s6, [#allocation5]
    $region57: #{tpu_custom_call.1} parent=1 // pred_fallthru
      _
    // Predicated region
    $region58: #{tpu_custom_call.1} parent=1 // pred_check
      _
    $region59: #{tpu_custom_call.1} parent=1 // pred_check_branch
      %683 = sbr.rel (0) target = $region61
    $region60: #{tpu_custom_call.1} parent=1 // pred_region
      %684 = dma.done [#allocation5], 16
    $region61: #{tpu_custom_call.1} parent=1 // pred_fallthru
      _
    %685 = sfence
    %686 = vsyncpa [#allocation4], 1
    %687 = vsyncpa [#allocation7], 1
    %688 = vsyncpa [#allocation10], 1
    %689 = vsyncpa [#allocation5], 1

</llo_original>
